<compile_context>
chip_gen: v7x
topology: tpu7x:2x2x1
jax: 0.10.0
libtpu: 0.0.40
codegen_flags: <defaults>
</compile_context>

<pallas_src>
import functools
import math

import jax
import jax.numpy as jnp
from jax import lax
from jax.experimental import pallas as pl
from jax.experimental.pallas import tpu as pltpu

MARGIN = 0.2
MASK_BIG = 3.0e30   # > any real (or padded) squared distance
PAD_SQ = 1.0e30     # squared-norm sentinel for padded batch rows


def _round_up(x, m):
    return ((x + m - 1) // m) * m


def _device_prefs():
    """Returns (preferred row tile, VMEM-limit cap in bytes) for this chip."""
    try:
        kind = jax.devices()[0].device_kind.lower()
    except Exception:
        kind = ""
    if "v5 lite" in kind or "v5e" in kind or "v5lite" in kind:
        return 128, 100 * 1024 * 1024          # v5e: 4x128x128 MXU, 128 MiB VMEM
    if "v7" in kind:
        return 256, 48 * 1024 * 1024           # v7x: only 64 MiB VMEM per TC
    if "v6" in kind or "v5" in kind or "v4" in kind:
        return 256, 100 * 1024 * 1024          # v6e / v5p / v4: 128 MiB VMEM
    return 256, 48 * 1024 * 1024               # unknown: assume the small VMEM


def _footprint_bytes(tile_b, tile_c, d_pad, itemsize):
    """Rough VMEM footprint for one grid step (double-buffered streams)."""
    buf = 2 * tile_b * d_pad * itemsize        # anchor row stream
    buf += 2 * d_pad * tile_c * itemsize       # candidate (transposed) stream
    buf += 4 * (tile_b + tile_c) * 8           # norms + labels streams
    buf += 4 * tile_b * 4                      # output block + hp2/hn2 scratch
    buf += 8 * tile_b * tile_c * 4             # live (TILE_B, TILE_C) f32 temps
    return buf


def _triplet_batch_hard_kernel(a_ref, et_ref, sqa_ref, sqc_ref,
                               laba_ref, labc_ref, tl_ref,
                               hp2_ref, hn2_ref, *, margin, tile_b, tile_c):
    """Row-block x column-block batch-hard mining with running max/min."""
    i = pl.program_id(0)
    j = pl.program_id(1)

    @pl.when(j == 0)
    def _():
        hp2_ref[...] = jnp.zeros_like(hp2_ref)
        hn2_ref[...] = jnp.full_like(hn2_ref, MASK_BIG)

    a = a_ref[...]                                   # (TB, Dp) native dtype
    et = et_ref[...]                                 # (Dp, TC) native dtype

    # Gram block on the MXU; plain NN contraction (candidates pre-transposed
    # in the wrapper), f32 accumulation.
    dot = lax.dot_general(a, et, (((1,), (0,)), ((), ())),
                          preferred_element_type=jnp.float32)   # (TB, TC)

    # Squared pairwise distances for this (row block, column block).
    d2 = sqa_ref[...] + sqc_ref[...] - 2.0 * dot                # (TB, TC)

    # Only remaining mask work: drop the diagonal.  (The reference includes
    # self at an exact 0.0, which never wins the positive max and is removed
    # from the negatives by the label mask, so excluding it is equivalent.
    # Padded columns are neutralized by sentinel labels + huge padded norms.)
    row = i * tile_b + lax.broadcasted_iota(jnp.int32, d2.shape, 0)
    col = j * tile_c + lax.broadcasted_iota(jnp.int32, d2.shape, 1)
    not_self = row != col

    equal = laba_ref[...] == labc_ref[...]                      # (TB, TC) bool

    pos_mask = jnp.logical_and(equal, not_self)
    hp2_blk = jnp.max(jnp.where(pos_mask, d2, 0.0), axis=1, keepdims=True)
    hn2_blk = jnp.min(jnp.where(equal, MASK_BIG, d2), axis=1, keepdims=True)

    hp2_ref[...] = jnp.maximum(hp2_ref[...], hp2_blk)
    hn2_ref[...] = jnp.minimum(hn2_ref[...], hn2_blk)

    @pl.when(j == pl.num_programs(1) - 1)
    def _():
        # sqrt only the 2*TILE_B mined values (relu-clamp first: FP noise can
        # make near-duplicate squared distances slightly negative).
        hp = jnp.sqrt(jnp.maximum(hp2_ref[...], 0.0))
        hn = jnp.sqrt(jnp.maximum(hn2_ref[...], 0.0))
        tl_ref[...] = jnp.maximum(hp - hn + margin, 0.0).astype(tl_ref.dtype)


def triplet_loss_batch_hard(embeddings, labels, margin=MARGIN,
                            tile_b=None, tile_c=None):
    """embeddings: (B, D) float; labels: (B,) int. Returns scalar f32 loss."""
    B, D = embeddings.shape
    itemsize = jnp.dtype(embeddings.dtype).itemsize
    sublane_min = {4: 8, 2: 16, 1: 32}.get(itemsize, 8)
    pref_tb, vmem_cap = _device_prefs()

    d_pad = _round_up(D, 128)

    if tile_b is None:
        tile_b = min(pref_tb, _round_up(B, sublane_min))
    assert tile_b % sublane_min == 0, "tile_b must honor the dtype sublane tile"

    if tile_c is None:
        # Prefer a fully resident candidate set (single column block); fall
        # back to column tiling when it would blow the VMEM budget.
        tile_c = _round_up(B, tile_b)
        if _footprint_bytes(tile_b, tile_c, d_pad, itemsize) > vmem_cap:
            for cand in (1024, 512, 256, 128):
                tile_c = cand
                if _footprint_bytes(tile_b, tile_c, d_pad, itemsize) <= vmem_cap:
                    break

    b_pad = _round_up(B, math.lcm(tile_b, tile_c))
    assert tile_c % 128 == 0 or tile_c == b_pad, "tile_c must be 128-aligned or full"

    # Pad, and build both layouts: row-major anchors + pre-transposed
    # candidates (one-time HBM transpose, avoids any per-step XLU transpose).
    e = jnp.pad(embeddings, ((0, b_pad - B), (0, d_pad - D)))
    e_t = e.T                                                      # (Dp, Bp)

    ridx = jnp.arange(b_pad)
    ef32 = e.astype(jnp.float32)
    sq = jnp.sum(ef32 * ef32, axis=1)
    sq = jnp.where(ridx < B, sq, PAD_SQ)           # padded rows: huge norm

    lab = labels.astype(jnp.int32)
    sentinel = jnp.min(lab) - 1                    # never equals a real label
    lab = jnp.where(ridx < B, jnp.pad(lab, (0, b_pad - B)), sentinel)

    grid = (b_pad // tile_b, b_pad // tile_c)
    kernel = functools.partial(_triplet_batch_hard_kernel, margin=float(margin),
                               tile_b=tile_b, tile_c=tile_c)

    footprint = _footprint_bytes(tile_b, tile_c, d_pad, itemsize)
    vmem_limit = int(min(vmem_cap, max(32 * 1024 * 1024, int(footprint * 1.3))))

    tl = pl.pallas_call(
        kernel,
        out_shape=jax.ShapeDtypeStruct((b_pad, 1), jnp.float32),
        grid_spec=pltpu.PrefetchScalarGridSpec(
            num_scalar_prefetch=0,
            grid=grid,
            in_specs=[
                pl.BlockSpec((tile_b, d_pad), lambda i, j: (i, 0)),   # anchor rows
                pl.BlockSpec((d_pad, tile_c), lambda i, j: (0, j)),   # candidates^T
                pl.BlockSpec((tile_b, 1), lambda i, j: (i, 0)),       # ||a||^2 col
                pl.BlockSpec((1, tile_c), lambda i, j: (0, j)),       # ||c||^2 row
                pl.BlockSpec((tile_b, 1), lambda i, j: (i, 0)),       # anchor labels
                pl.BlockSpec((1, tile_c), lambda i, j: (0, j)),       # cand. labels
            ],
            out_specs=pl.BlockSpec((tile_b, 1), lambda i, j: (i, 0)),
            scratch_shapes=[pltpu.VMEM((tile_b, 1), jnp.float32),
                            pltpu.VMEM((tile_b, 1), jnp.float32)],
        ),
        compiler_params=pltpu.CompilerParams(
            dimension_semantics=("parallel", "arbitrary"),
            vmem_limit_bytes=vmem_limit,
        ),
    )(e, e_t,
      sq.reshape(b_pad, 1), sq.reshape(1, b_pad),
      lab.reshape(b_pad, 1), lab.reshape(1, b_pad))

    # Tiny O(B) scalar reduction over per-anchor losses (plain JAX).
    tl = tl[:B, 0]
    valid = (tl > 1e-16).astype(jnp.float32)
    num_pos = jnp.sum(valid)
    return jnp.where(num_pos == 0.0, jnp.float32(0.0),
                     jnp.sum(tl) / (num_pos + 1e-16))


def triplet_loss_ref(embeddings, labels, margin=MARGIN):
    """Pure-JAX reference mirroring the PyTorch batch_hard forward."""
    e = embeddings.astype(jnp.float32)
    dot = jnp.matmul(e, e.T, precision=jax.lax.Precision.HIGHEST)
    sq = jnp.diag(dot)
    dist = sq[None, :] - 2.0 * dot + sq[:, None]
    dist = jnp.maximum(dist, 0.0)
    mask = (dist == 0.0).astype(jnp.float32)
    dist = jnp.sqrt(dist + mask * 1e-16) * (1.0 - mask)
    equal = (labels[:, None] == labels[None, :]).astype(jnp.float32)
    hp = jnp.max(dist * equal, axis=1)
    hn = jnp.min(dist + equal * jnp.max(dist), axis=1)
    tl = jnp.maximum(hp - hn + margin, 0.0)
    npos = jnp.sum((tl > 1e-16).astype(jnp.float32))
    return jnp.where(npos == 0.0, 0.0, jnp.sum(tl) / (npos + 1e-16))


if __name__ == "__main__":
    key = jax.random.PRNGKey(0)
    k1, k2, k3, k4 = jax.random.split(key, 4)

    # Test 1: tiny batch -> single resident candidate block (grid (1, 1)).
    B1, D1 = 8, 32
    emb1 = jax.random.normal(k1, (B1, D1), dtype=jnp.float32)
    lab1 = jax.random.randint(k2, (B1,), 0, 4, dtype=jnp.int32)
    out1 = jax.block_until_ready(triplet_loss_batch_hard(emb1, lab1))
    ref1 = jax.block_until_ready(triplet_loss_ref(emb1, lab1))
    assert jnp.isfinite(out1), "kernel produced non-finite loss"
    assert abs(float(out1) - float(ref1)) < 2e-3 * max(1.0, abs(float(ref1))), \
        (float(out1), float(ref1))

    # Test 2: forced row + column tiling (grid (4, 2)) to exercise the
    # running-max/min scratch path used when the candidate set is too large
    # to keep resident in VMEM.
    B2, D2 = 200, 48
    emb2 = jax.random.normal(k3, (B2, D2), dtype=jnp.float32)
    lab2 = jax.random.randint(k4, (B2,), 0, 8, dtype=jnp.int32)
    out2 = jax.block_until_ready(
        triplet_loss_batch_hard(emb2, lab2, tile_b=64, tile_c=128))
    ref2 = jax.block_until_ready(triplet_loss_ref(emb2, lab2))
    assert jnp.isfinite(out2), "kernel produced non-finite loss"
    assert abs(float(out2) - float(ref2)) < 2e-3 * max(1.0, abs(float(ref2))), \
        (float(out2), float(ref2))

    print("KERNEL_OK")
</pallas_src>

<mosaic_0001>
module attributes {stable_mosaic.version = 11 : i64} {
  func.func @_triplet_batch_hard_kernel(%arg0: i32, %arg1: i32, %arg2: memref<8x128xf32, #tpu.memory_space<vmem>>, %arg3: memref<128x8xf32, #tpu.memory_space<vmem>>, %arg4: memref<8x1xf32, #tpu.memory_space<vmem>>, %arg5: memref<1x8xf32, #tpu.memory_space<vmem>>, %arg6: memref<8x1xi32, #tpu.memory_space<vmem>>, %arg7: memref<1x8xi32, #tpu.memory_space<vmem>>, %arg8: memref<8x1xf32, #tpu.memory_space<vmem>>, %arg9: memref<8x1xf32, #tpu.memory_space<vmem>>, %arg10: memref<8x1xf32, #tpu.memory_space<vmem>>) attributes {dimension_semantics = [#tpu.dimension_semantics<parallel>, #tpu.dimension_semantics<arbitrary>], iteration_bounds = array<i64: 1, 1>, scalar_prefetch = 0 : i64, scratch_operands = 2 : i64, tpu.core_type = #tpu.core_type<tc>, window_params = [{transform_indices = @transform_0, window_bounds = array<i64: 8, 128>}, {transform_indices = @transform_1, window_bounds = array<i64: 128, 8>}, {transform_indices = @transform_2, window_bounds = array<i64: 8, 1>}, {transform_indices = @transform_3, window_bounds = array<i64: 1, 8>}, {transform_indices = @transform_4, window_bounds = array<i64: 8, 1>}, {transform_indices = @transform_5, window_bounds = array<i64: 1, 8>}, {transform_indices = @transform_6, window_bounds = array<i64: 8, 1>}]} {
    %c0_i32 = arith.constant 0 : i32
    %0 = arith.cmpi eq, %arg1, %c0_i32 : i32
    %1 = arith.extui %0 : i1 to i32
    %c0_i32_0 = arith.constant 0 : i32
    %2 = arith.cmpi ne, %1, %c0_i32_0 : i32
    scf.if %2 {
      %cst_28 = arith.constant 0.000000e+00 : f32
      %46 = vector.broadcast %cst_28 : f32 to vector<8x1xf32>
      %c0_29 = arith.constant 0 : index
      %c0_30 = arith.constant 0 : index
      %47 = vector.load %arg9[%c0_29, %c0_30] : memref<8x1xf32, #tpu.memory_space<vmem>>, vector<8x1xf32>
      tpu.vector_store %arg9[%c0_29, %c0_30], %46 {strides = array<i32>} : memref<8x1xf32, #tpu.memory_space<vmem>>, vector<8x1xf32>,
      %cst_31 = arith.constant 3.000000e+30 : f32
      %48 = vector.broadcast %cst_31 : f32 to vector<8x1xf32>
      %c0_32 = arith.constant 0 : index
      %c0_33 = arith.constant 0 : index
      %49 = vector.load %arg10[%c0_32, %c0_33] : memref<8x1xf32, #tpu.memory_space<vmem>>, vector<8x1xf32>
      tpu.vector_store %arg10[%c0_32, %c0_33], %48 {strides = array<i32>} : memref<8x1xf32, #tpu.memory_space<vmem>>, vector<8x1xf32>,
    } else {
    }
    %c0 = arith.constant 0 : index
    %c0_1 = arith.constant 0 : index
    %3 = vector.load %arg2[%c0, %c0_1] : memref<8x128xf32, #tpu.memory_space<vmem>>, vector<8x128xf32>
    %c0_2 = arith.constant 0 : index
    %c0_3 = arith.constant 0 : index
    %4 = vector.load %arg3[%c0_2, %c0_3] : memref<128x8xf32, #tpu.memory_space<vmem>>, vector<128x8xf32>
    %cst = arith.constant dense<0.000000e+00> : vector<8x8xf32>
    %5 = tpu.matmul %3, %4, %cst {dimension_numbers = #tpu.dot_dimension_numbers<[1], [0], [0], [1], [0, 0, 1, 1], [], []>} : vector<8x128xf32>, vector<128x8xf32>, vector<8x8xf32> -> vector<8x8xf32>
    %c0_4 = arith.constant 0 : index
    %c0_5 = arith.constant 0 : index
    %6 = vector.load %arg4[%c0_4, %c0_5] : memref<8x1xf32, #tpu.memory_space<vmem>>, vector<8x1xf32>
    %c0_6 = arith.constant 0 : index
    %c0_7 = arith.constant 0 : index
    %7 = vector.load %arg5[%c0_6, %c0_7] : memref<1x8xf32, #tpu.memory_space<vmem>>, vector<1x8xf32>
    %8 = vector.broadcast %6 : vector<8x1xf32> to vector<8x8xf32>
    %9 = vector.broadcast %7 : vector<1x8xf32> to vector<8x8xf32>
    %10 = arith.addf %8, %9 : vector<8x8xf32>
    %cst_8 = arith.constant 2.000000e+00 : f32
    %11 = vector.broadcast %cst_8 : f32 to vector<8x8xf32>
    %12 = arith.mulf %11, %5 : vector<8x8xf32>
    %13 = arith.subf %10, %12 : vector<8x8xf32>
    %c8_i32 = arith.constant 8 : i32
    %14 = arith.muli %arg0, %c8_i32 : i32
    %15 = tpu.iota {dimensions = array<i32: 0>} : vector<8x8xi32>
    %16 = vector.broadcast %14 : i32 to vector<8x8xi32>
    %17 = arith.addi %16, %15 : vector<8x8xi32>
    %c8_i32_9 = arith.constant 8 : i32
    %18 = arith.muli %arg1, %c8_i32_9 : i32
    %19 = tpu.iota {dimensions = array<i32: 1>} : vector<8x8xi32>
    %20 = vector.broadcast %18 : i32 to vector<8x8xi32>
    %21 = arith.addi %20, %19 : vector<8x8xi32>
    %22 = arith.cmpi ne, %17, %21 : vector<8x8xi32>
    %c0_10 = arith.constant 0 : index
    %c0_11 = arith.constant 0 : index
    %23 = vector.load %arg6[%c0_10, %c0_11] : memref<8x1xi32, #tpu.memory_space<vmem>>, vector<8x1xi32>
    %c0_12 = arith.constant 0 : index
    %c0_13 = arith.constant 0 : index
    %24 = vector.load %arg7[%c0_12, %c0_13] : memref<1x8xi32, #tpu.memory_space<vmem>>, vector<1x8xi32>
    %25 = vector.broadcast %23 : vector<8x1xi32> to vector<8x8xi32>
    %26 = vector.broadcast %24 : vector<1x8xi32> to vector<8x8xi32>
    %27 = arith.cmpi eq, %25, %26 : vector<8x8xi32>
    %28 = arith.andi %27, %22 : vector<8x8xi1>
    %cst_14 = arith.constant 0.000000e+00 : f32
    %29 = vector.broadcast %cst_14 : f32 to vector<8x8xf32>
    %30 = arith.select %28, %13, %29 : vector<8x8xi1>, vector<8x8xf32>
    %cst_15 = arith.constant dense<0xFF800000> : vector<8xf32>
    %31 = vector.multi_reduction <maximumf>, %30, %cst_15 [1] : vector<8x8xf32> to vector<8xf32>
    %32 = vector.shape_cast %31 : vector<8xf32> to vector<8x1xf32>
    %cst_16 = arith.constant 3.000000e+30 : f32
    %33 = vector.broadcast %cst_16 : f32 to vector<8x8xf32>
    %34 = arith.select %27, %33, %13 : vector<8x8xi1>, vector<8x8xf32>
    %cst_17 = arith.constant dense<0x7F800000> : vector<8xf32>
    %35 = vector.multi_reduction <minimumf>, %34, %cst_17 [1] : vector<8x8xf32> to vector<8xf32>
    %36 = vector.shape_cast %35 : vector<8xf32> to vector<8x1xf32>
    %c0_18 = arith.constant 0 : index
    %c0_19 = arith.constant 0 : index
    %37 = vector.load %arg9[%c0_18, %c0_19] : memref<8x1xf32, #tpu.memory_space<vmem>>, vector<8x1xf32>
    %38 = arith.maximumf %37, %32 : vector<8x1xf32>
    %c0_20 = arith.constant 0 : index
    %c0_21 = arith.constant 0 : index
    %39 = vector.load %arg9[%c0_20, %c0_21] : memref<8x1xf32, #tpu.memory_space<vmem>>, vector<8x1xf32>
    tpu.vector_store %arg9[%c0_20, %c0_21], %38 {strides = array<i32>} : memref<8x1xf32, #tpu.memory_space<vmem>>, vector<8x1xf32>,
    %c0_22 = arith.constant 0 : index
    %c0_23 = arith.constant 0 : index
    %40 = vector.load %arg10[%c0_22, %c0_23] : memref<8x1xf32, #tpu.memory_space<vmem>>, vector<8x1xf32>
    %41 = arith.minimumf %40, %36 : vector<8x1xf32>
    %c0_24 = arith.constant 0 : index
    %c0_25 = arith.constant 0 : index
    %42 = vector.load %arg10[%c0_24, %c0_25] : memref<8x1xf32, #tpu.memory_space<vmem>>, vector<8x1xf32>
    tpu.vector_store %arg10[%c0_24, %c0_25], %41 {strides = array<i32>} : memref<8x1xf32, #tpu.memory_space<vmem>>, vector<8x1xf32>,
    %c0_i32_26 = arith.constant 0 : i32
    %43 = arith.cmpi eq, %arg1, %c0_i32_26 : i32
    %44 = arith.extui %43 : i1 to i32
    %c0_i32_27 = arith.constant 0 : i32
    %45 = arith.cmpi ne, %44, %c0_i32_27 : i32
    scf.if %45 {
      %c0_28 = arith.constant 0 : index
      %c0_29 = arith.constant 0 : index
      %46 = vector.load %arg9[%c0_28, %c0_29] : memref<8x1xf32, #tpu.memory_space<vmem>>, vector<8x1xf32>
      %cst_30 = arith.constant 0.000000e+00 : f32
      %47 = vector.broadcast %cst_30 : f32 to vector<8x1xf32>
      %48 = arith.maximumf %46, %47 : vector<8x1xf32>
      %49 = math.sqrt %48 : vector<8x1xf32>
      %c0_31 = arith.constant 0 : index
      %c0_32 = arith.constant 0 : index
      %50 = vector.load %arg10[%c0_31, %c0_32] : memref<8x1xf32, #tpu.memory_space<vmem>>, vector<8x1xf32>
      %cst_33 = arith.constant 0.000000e+00 : f32
      %51 = vector.broadcast %cst_33 : f32 to vector<8x1xf32>
      %52 = arith.maximumf %50, %51 : vector<8x1xf32>
      %53 = math.sqrt %52 : vector<8x1xf32>
      %54 = arith.subf %49, %53 : vector<8x1xf32>
      %cst_34 = arith.constant 2.000000e-01 : f32
      %55 = vector.broadcast %cst_34 : f32 to vector<8x1xf32>
      %56 = arith.addf %54, %55 : vector<8x1xf32>
      %cst_35 = arith.constant 0.000000e+00 : f32
      %57 = vector.broadcast %cst_35 : f32 to vector<8x1xf32>
      %58 = arith.maximumf %56, %57 : vector<8x1xf32>
      %c0_36 = arith.constant 0 : index
      %c0_37 = arith.constant 0 : index
      %59 = vector.load %arg8[%c0_36, %c0_37] : memref<8x1xf32, #tpu.memory_space<vmem>>, vector<8x1xf32>
      tpu.vector_store %arg8[%c0_36, %c0_37], %58 {strides = array<i32>} : memref<8x1xf32, #tpu.memory_space<vmem>>, vector<8x1xf32>,
    } else {
    }
    return
  }
  func.func @transform_0(%arg0: i32, %arg1: i32) -> (i32, i32) {
    %c0_i32 = arith.constant 0 : i32
    %c0_i32_0 = arith.constant 0 : i32
    return %arg0, %c0_i32 : i32, i32
  }
  func.func @transform_1(%arg0: i32, %arg1: i32) -> (i32, i32) {
    %c0_i32 = arith.constant 0 : i32
    %c0_i32_0 = arith.constant 0 : i32
    return %c0_i32, %arg1 : i32, i32
  }
  func.func @transform_2(%arg0: i32, %arg1: i32) -> (i32, i32) {
    %c0_i32 = arith.constant 0 : i32
    %c0_i32_0 = arith.constant 0 : i32
    return %arg0, %c0_i32 : i32, i32
  }
  func.func @transform_3(%arg0: i32, %arg1: i32) -> (i32, i32) {
    %c0_i32 = arith.constant 0 : i32
    %c0_i32_0 = arith.constant 0 : i32
    return %c0_i32, %arg1 : i32, i32
  }
  func.func @transform_4(%arg0: i32, %arg1: i32) -> (i32, i32) {
    %c0_i32 = arith.constant 0 : i32
    %c0_i32_0 = arith.constant 0 : i32
    return %arg0, %c0_i32 : i32, i32
  }
  func.func @transform_5(%arg0: i32, %arg1: i32) -> (i32, i32) {
    %c0_i32 = arith.constant 0 : i32
    %c0_i32_0 = arith.constant 0 : i32
    return %c0_i32, %arg1 : i32, i32
  }
  func.func @transform_6(%arg0: i32, %arg1: i32) -> (i32, i32) {
    %c0_i32 = arith.constant 0 : i32
    %c0_i32_0 = arith.constant 0 : i32
    return %arg0, %c0_i32 : i32, i32
  }
}

</mosaic_0001>

<llo_original>
// kernel: tpu_custom_call.1
$region0: #{tpu_custom_call.1}
  #allocation0 [shape = 'u32[]', space=smem, size = 0x4, offset = 0x4, fixed_abs, tag = 'smem constant byte address 0x4 - core index']
  #allocation1 [shape = 'u32[144,128]{1,0:T(1,128)}', space=vmem, size = 0x12000, scoped, tag = 'internal scratch']
  #allocation2 [shape = 'f32[8,1]{1,0:T(8,128)}', space=vmem, size = 0x1000, scoped, tag = 'scratch operand']
  #allocation3 [shape = 'f32[8,1]{1,0:T(8,128)}', space=vmem, size = 0x1000, scoped, tag = 'scratch operand']
  %s0 = inlined_call_operand.vmem [shape: f32[8,128], index: 0, kind: input, shape index: {}]
  %s1 = inlined_call_operand.vmem [shape: f32[128,8], index: 1, kind: input, shape index: {}]
  %s2 = inlined_call_operand.vmem [shape: f32[8,1], index: 2, kind: input, shape index: {}]
  %s3 = inlined_call_operand.vmem [shape: f32[1,8], index: 3, kind: input, shape index: {}]
  %s4 = inlined_call_operand.vmem [shape: s32[8,1], index: 4, kind: input, shape index: {}]
  %s5 = inlined_call_operand.vmem [shape: s32[1,8], index: 5, kind: input, shape index: {}]
  %s6 = inlined_call_operand.vmem [shape: f32[8,1], index: 6, kind: output, shape index: {}]
  %s7 = sld [smem:[#allocation0]]
  $region42: #{tpu_custom_call.1} parent=0
    _
  %s9 = ssub.s32 1, %s7
  %s10 = scalar_select 0, %s9, %s7
  // Predicated region
  $region2: #{tpu_custom_call.1} parent=0 // pred_check
    _
  $region3: #{tpu_custom_call.1} parent=0 // pred_check_branch
    %12 = sbr.rel (0) target = $region5
  $region4: #{tpu_custom_call.1} parent=0 // pred_region
    _
  $region5: #{tpu_custom_call.1} parent=0 // pred_fallthru
    _
  // Predicated region
  $region6: #{tpu_custom_call.1} parent=0 // pred_check
    _
  $region7: #{tpu_custom_call.1} parent=0 // pred_check_branch
    %14 = sbr.rel (0) target = $region9
  $region8: #{tpu_custom_call.1} parent=0 // pred_region
    _
  $region9: #{tpu_custom_call.1} parent=0 // pred_fallthru
    _
  // Predicated region
  $region10: #{tpu_custom_call.1} parent=0 // pred_check
    _
  $region11: #{tpu_custom_call.1} parent=0 // pred_check_branch
    %16 = sbr.rel (0) target = $region13
  $region12: #{tpu_custom_call.1} parent=0 // pred_region
    _
  $region13: #{tpu_custom_call.1} parent=0 // pred_fallthru
    _
  // Predicated region
  $region14: #{tpu_custom_call.1} parent=0 // pred_check
    _
  $region15: #{tpu_custom_call.1} parent=0 // pred_check_branch
    %18 = sbr.rel (0) target = $region17
  $region16: #{tpu_custom_call.1} parent=0 // pred_region
    _
  $region17: #{tpu_custom_call.1} parent=0 // pred_fallthru
    _
  // Predicated region
  $region18: #{tpu_custom_call.1} parent=0 // pred_check
    _
  $region19: #{tpu_custom_call.1} parent=0 // pred_check_branch
    %20 = sbr.rel (0) target = $region21
  $region20: #{tpu_custom_call.1} parent=0 // pred_region
    _
  $region21: #{tpu_custom_call.1} parent=0 // pred_fallthru
    _
  // Predicated region
  $region22: #{tpu_custom_call.1} parent=0 // pred_check
    _
  $region23: #{tpu_custom_call.1} parent=0 // pred_check_branch
    %22 = sbr.rel (0) target = $region25
  $region24: #{tpu_custom_call.1} parent=0 // pred_region
    _
  $region25: #{tpu_custom_call.1} parent=0 // pred_fallthru
    _
  %p23 = scmp.eq.s32.totalorder 0, 0
  // Predicated region
  $region26: #{tpu_custom_call.1} parent=0 // pred_check
    %p24 = pneg %p23
  $region27: #{tpu_custom_call.1} parent=0 // pred_check_branch
    %26 = sbr.rel (%p24) target = $region29
  $region28: #{tpu_custom_call.1} parent=0 // pred_region
    %vm27 = vcmask 7168
    %28 = vst.msk [vmem:[#allocation2] sm:$0xff] %vm27, 0.0
    %29 = vst.msk [vmem:[#allocation3] sm:$0xff] %vm27, 3e+30
  $region29: #{tpu_custom_call.1} parent=0 // pred_fallthru
    _
  %v30 = vld [vmem:[%s0] sm:$0xff]
  %v31 = vld [vmem:[%s1] sm:$0xff]
  %v32 = vld [vmem:[%s1 + $0x8] sm:$0xff]
  %v33 = vld [vmem:[%s1 + $0x10] sm:$0xff]
  %v34 = vld [vmem:[%s1 + $0x18] sm:$0xff]
  %v35 = vld [vmem:[%s1 + $0x20] sm:$0xff]
  %v36 = vld [vmem:[%s1 + $0x28] sm:$0xff]
  %v37 = vld [vmem:[%s1 + $0x30] sm:$0xff]
  %v38 = vld [vmem:[%s1 + $0x38] sm:$0xff]
  %v39 = vld [vmem:[%s1 + $0x40] sm:$0xff]
  %v40 = vld [vmem:[%s1 + $0x48] sm:$0xff]
  %v41 = vld [vmem:[%s1 + $0x50] sm:$0xff]
  %v42 = vld [vmem:[%s1 + $0x58] sm:$0xff]
  %v43 = vld [vmem:[%s1 + $0x60] sm:$0xff]
  %v44 = vld [vmem:[%s1 + $0x68] sm:$0xff]
  %v45 = vld [vmem:[%s1 + $0x70] sm:$0xff]
  %v46 = vld [vmem:[%s1 + $0x78] sm:$0xff]
  %47 = vmatprep.subr.mxu0 0.0
  %48 = vmatpush1.msra.mxu0 %v31
  %49 = vmatprep.subr.mxu0 0.0
  %50 = vmatpush1.msra.mxu0 %v32
  %51 = vmatprep.subr.mxu0 0.0
  %52 = vmatpush1.msra.mxu0 %v33
  %53 = vmatprep.subr.mxu0 0.0
  %54 = vmatpush1.msra.mxu0 %v34
  %55 = vmatprep.subr.mxu0 0.0
  %56 = vmatpush1.msra.mxu0 %v35
  %57 = vmatprep.subr.mxu0 0.0
  %58 = vmatpush1.msra.mxu0 %v36
  %59 = vmatprep.subr.mxu0 0.0
  %60 = vmatpush1.msra.mxu0 %v37
  %61 = vmatprep.subr.mxu0 0.0
  %62 = vmatpush1.msra.mxu0 %v38
  %63 = vmatprep.subr.mxu0 0.0
  %64 = vmatpush1.msra.mxu0 %v39
  %65 = vmatprep.subr.mxu0 0.0
  %66 = vmatpush1.msra.mxu0 %v40
  %67 = vmatprep.subr.mxu0 0.0
  %68 = vmatpush1.msra.mxu0 %v41
  %69 = vmatprep.subr.mxu0 0.0
  %70 = vmatpush1.msra.mxu0 %v42
  %71 = vmatprep.subr.mxu0 0.0
  %72 = vmatpush1.msra.mxu0 %v43
  %73 = vmatprep.subr.mxu0 0.0
  %74 = vmatpush1.msra.mxu0 %v44
  %75 = vmatprep.subr.mxu0 0.0
  %76 = vmatpush1.msra.mxu0 %v45
  %77 = vmatprep.subr.mxu0 0.0
  %78 = vmatpush1.msra.mxu0 %v46
  %79 = vmatprep.subr.mxu0 0.0
  %80 = vmatpush1.msra.mxu0 0.0
  %81 = vmatprep.subr.mxu0 0.0
  %82 = vmatpush1.msra.mxu0 0.0
  %83 = vmatprep.subr.mxu0 0.0
  %84 = vmatpush1.msra.mxu0 0.0
  %85 = vmatprep.subr.mxu0 0.0
  %86 = vmatpush1.msra.mxu0 0.0
  %87 = vmatprep.subr.mxu0 0.0
  %88 = vmatpush1.msra.mxu0 0.0
  %89 = vmatprep.subr.mxu0 0.0
  %90 = vmatpush1.msra.mxu0 0.0
  %91 = vmatprep.subr.mxu0 0.0
  %92 = vmatpush1.msra.mxu0 0.0
  %93 = vmatprep.subr.mxu0 0.0
  %94 = vmatpush1.msra.mxu0 0.0
  %95 = vmatprep.subr.mxu0 0.0
  %96 = vmatpush1.msra.mxu0 0.0
  %97 = vmatprep.subr.mxu0 0.0
  %98 = vmatpush1.msra.mxu0 0.0
  %99 = vmatprep.subr.mxu0 0.0
  %100 = vmatpush1.msra.mxu0 0.0
  %101 = vmatprep.subr.mxu0 0.0
  %102 = vmatpush1.msra.mxu0 0.0
  %103 = vmatprep.subr.mxu0 0.0
  %104 = vmatpush1.msra.mxu0 0.0
  %105 = vmatprep.subr.mxu0 0.0
  %106 = vmatpush1.msra.mxu0 0.0
  %107 = vmatprep.subr.mxu0 0.0
  %108 = vmatpush1.msra.mxu0 0.0
  %109 = vmatprep.subr.mxu0 0.0
  %110 = vmatpush1.msra.mxu0 0.0
  %111 = vmatprep.mubr.f32.mxu0 0.0
  %112 = vmatmul.mubr.f32.gmra.mrb[0].mxu0 %v30
  %v113 = vpop.f32.mrb[0].mxu0
  %v114 = vadd.f32 0.0, %v113
  %v115 = vpop.f32.mrb[0].mxu0
  %116 = vdwg.mxu0
  %v117 = vld [vmem:[%s2] sm:$0xff]
  %v118 = vld [vmem:[%s3] sm:$0x1]
  %120 = vset.pattern.permute.xlu0 0
  %121 = vperm.xlu0 %120, %v117
  %v122 = vpop.permute.xlu0 %121
  %v125 = vlaneseq
  %v126 = vshrl.u32 %v125, 7
  %v127 = vsub.s32 0, %v126
  %v128 = vrot.slane %v118, %v127
  %v130 = vadd.f32 %v122, %v128
  %v131 = vmul.f32 %v114, 2.0
  %v132 = vsub.f32 %v130, %v131
  %s133 = smul.u32 0, 8
  %v134 = vlaneseq
  %v135 = vshrl.u32 %v134, 7
  %v136 = vstv %s133
  %v137 = vadd.s32 %v136, %v135
  %s138 = smul.u32 0, 8
  %v139 = vlaneseq
  %v140 = vand.u32 %v139, 127
  %v141 = vstv %s138
  %v142 = vadd.s32 %v141, %v140
  %vm143 = vcmp.ne.s32.totalorder %v137, %v142
  %v144 = vld [vmem:[%s4] sm:$0xff]
  %v145 = vld [vmem:[%s5] sm:$0x1]
  %146 = vset.pattern.permute.xlu0 0
  %147 = vperm.xlu0 %146, %v144
  %v148 = vpop.permute.xlu0 %147
  %v149 = vlaneseq
  %v150 = vshrl.u32 %v149, 7
  %v151 = vsub.s32 0, %v150
  %v152 = vrot.slane %v145, %v151
  %vm153 = vcmp.eq.s32.totalorder %v148, %v152
  %vm154 = vmand %vm153, %vm143
  %v155 = vsel %vm154, %v132, 0.0
  %vm156 = vcmask 64512
  %v157 = vsel %vm156, %v155, -inf
  %158 = vmax.xlane.f32.xlu0 %v157
  %v159 = vpop.xlane.xlu0 %158
  %v160 = vsel %vm153, 3e+30, %v132
  %v161 = vsel %vm156, %v160, inf
  %162 = vmin.xlane.f32.xlu0 %v161
  %v163 = vpop.xlane.xlu0 %162
  %v164 = vld [vmem:[#allocation2] sm:$0xff]
  %v165 = vmax.f32 %v164, %v159
  %vm166 = vcmask 7168
  %167 = vst.msk [vmem:[#allocation2] sm:$0xff] %vm166, %v165
  %v168 = vld [vmem:[#allocation3] sm:$0xff]
  %v169 = vmin.f32 %v168, %v163
  %170 = vst.msk [vmem:[#allocation3] sm:$0xff] %vm166, %v169
  // Predicated region
  $region30: #{tpu_custom_call.1} parent=0 // pred_check
    %p171 = pneg %p23
  $region31: #{tpu_custom_call.1} parent=0 // pred_check_branch
    %173 = sbr.rel (%p171) target = $region33
  $region32: #{tpu_custom_call.1} parent=0 // pred_region
    %v174 = vld [vmem:[#allocation2] sm:$0xff]
    %v175 = vmax.f32 %v174, 0.0
    %v176 = vrsqrt.pop %v175
    %v177 = vmul.f32 %v175, %v176
    %vm178 = vcmp.eq.f32.partialorder %v175, inf
    %v179 = vsel %vm178, %v175, %v177
    %vm180 = vcmp.eq.f32.partialorder %v175, 0.0
    %v181 = vand.u32 %v175, 2147483648
    %v182 = vsel %vm180, %v181, %v179
    %v183 = vld [vmem:[#allocation3] sm:$0xff]
    %v184 = vmax.f32 %v183, 0.0
    %v185 = vrsqrt.pop %v184
    %v186 = vmul.f32 %v184, %v185
    %vm187 = vcmp.eq.f32.partialorder %v184, inf
    %v188 = vsel %vm187, %v184, %v186
    %vm189 = vcmp.eq.f32.partialorder %v184, 0.0
    %v190 = vand.u32 %v184, 2147483648
    %v191 = vsel %vm189, %v190, %v188
    %v192 = vsub.f32 %v182, %v191
    %v193 = vadd.f32 %v192, 0.2
    %v194 = vmax.f32 %v193, 0.0
    %195 = vst.msk [vmem:[%s6] sm:$0xff] %vm166, %v194
  $region33: #{tpu_custom_call.1} parent=0 // pred_fallthru
    _
  // Predicated region
  $region34: #{tpu_custom_call.1} parent=0 // pred_check
    _
  $region35: #{tpu_custom_call.1} parent=0 // pred_check_branch
    %197 = sbr.rel (0) target = $region37
  $region36: #{tpu_custom_call.1} parent=0 // pred_region
    _
  $region37: #{tpu_custom_call.1} parent=0 // pred_fallthru
    _
  // Predicated region
  $region38: #{tpu_custom_call.1} parent=0 // pred_check
    _
  $region39: #{tpu_custom_call.1} parent=0 // pred_check_branch
    %199 = sbr.rel (0) target = $region41
  $region40: #{tpu_custom_call.1} parent=0 // pred_region
    _
  $region41: #{tpu_custom_call.1} parent=0 // pred_fallthru
    _

</llo_original>
